<compile_context>
chip_gen: v7x
topology: tpu7x:2x2x1
jax: 0.10.0
libtpu: 0.0.40
codegen_flags: <defaults>
</compile_context>

<pallas_src>
import jax
import jax.numpy as jnp
from jax.experimental import pallas as pl
from jax.experimental.pallas import tpu as pltpu

# ----- static "graph schema" (fixed at trace time) ---------------------------
N_TYPES   = 2          # ntypes: ("user", "item")
N         = 8          # nodes per type (equal counts -> exact mean readout)
IN_DIM    = 16
HID       = 32
N_CLASSES = 4
C_PAD     = 128        # classifier output padded to a full lane row

# relations: (name, src_type_index, dst_type_index)
RELS   = (("follows", 0, 0), ("buys", 0, 1), ("bought_by", 1, 0))
N_RELS = len(RELS)
RSLOTS = 4             # relation slots padded to 4 -> RSLOTS*HID == 128 (lane-dense tail)

# runtime feature operand: block-diagonal node features, built in the wrapper
XBD_ROWS = RSLOTS * N        # 32
XBD_COLS = RSLOTS * IN_DIM   # 64

# Row layout of the single packed bf16 slab `wp` (128 lanes wide).
# Every block offset is a multiple of 16 (the bf16 sublane tile height).
W1_ROW  = 0                               # rows   0: 64  vstack_r W1_r, lane-replicated x RSLOTS
A_ROW   = W1_ROW + RSLOTS * IN_DIM        # rows  64: 80  block adjacency (dst-block x rel-block)
B1_ROW  = A_ROW + N_TYPES * N             # rows  80: 96  per-dst conv1 bias sum, bcast over N, lane-rep x4
M3_ROW  = B1_ROW + N_TYPES * N            # rows  96:112  readout mask carrying u_r = (1/N) 1^T A_r
F_ROW   = M3_ROW + N_TYPES * N            # rows 112:240  vstack_r (W2_r @ Wc), zero-padded lanes
BF_ROW  = F_ROW + RSLOTS * HID            # row  240      folded tail bias (b2-sum @ Wc + bc)
WP_ROWS = BF_ROW + 16                     # 256
WP_COLS = 128
assert all(off % 16 == 0 for off in (W1_ROW, A_ROW, B1_ROW, M3_ROW, F_ROW, BF_ROW, WP_ROWS))


# ----- Pallas kernel: entire forward pass, 3 MXU dots, no in-kernel relayouts -
def hetero_classifier_kernel(xbd_ref, wp_ref, out_ref):
    f32, bf16 = jnp.float32, jnp.bfloat16

    # dot 1: T_r = X[src(r)] @ W1_r, sublane-stacked in relation order,
    #        lane-replicated across the 4 relation slots (full 128-lane RHS read).
    w1rep = wp_ref[W1_ROW:W1_ROW + RSLOTS * IN_DIM, :]                    # (64, 128) bf16
    t = jnp.dot(xbd_ref[...], w1rep, preferred_element_type=f32)         # (32, 128) f32

    # dot 2: both dst ntypes in one block-adjacency dot; bias add + ReLU in f32.
    a_big = wp_ref[A_ROW:A_ROW + N_TYPES * N, 0:RSLOTS * N]              # (16, 32) bf16
    h1 = jnp.dot(a_big, t.astype(bf16), preferred_element_type=f32)      # (16, 128) f32
    h1 = h1 + wp_ref[B1_ROW:B1_ROW + N_TYPES * N, :].astype(f32)
    h1 = jnp.maximum(h1, 0.0)                                            # h1[:, r*HID:(r+1)*HID] == h1 for all r

    # folded conv2 -> mean readout: Vflat[0, r*HID+h] = (u_r @ h1[src(r)])[h]
    # via a precomputed mask-with-values (VPU mul) + sublane column sum (XLU); no MXU dot.
    m3 = wp_ref[M3_ROW:M3_ROW + N_TYPES * N, :].astype(f32)              # (16, 128) f32
    v_flat = jnp.sum(h1 * m3, axis=0, keepdims=True)                     # (1, 128) f32

    # tail dot: folded (W2_r @ Wc) stack, full (128, 128) lane-dense tile; folded bias add.
    f_stack = wp_ref[F_ROW:F_ROW + RSLOTS * HID, :]                      # (128, 128) bf16
    out = jnp.dot(v_flat.astype(bf16), f_stack, preferred_element_type=f32)   # (1, 128) f32
    out_ref[...] = out + wp_ref[BF_ROW:BF_ROW + 1, :].astype(f32)


def _cost_estimate():
    flops = (2 * XBD_ROWS * XBD_COLS * WP_COLS            # Xbd @ W1rep
             + 2 * (N_TYPES * N) * (RSLOTS * N) * WP_COLS  # Abig @ T
             + 2 * 1 * (RSLOTS * HID) * C_PAD              # Vflat @ Fstack
             + 3 * (N_TYPES * N) * WP_COLS)                # bias + relu + mask-mul (VPU)
    bytes_accessed = (XBD_ROWS * XBD_COLS * 2 + WP_ROWS * WP_COLS * 2 + C_PAD * 4)
    return pl.CostEstimate(flops=flops, transcendentals=0, bytes_accessed=bytes_accessed)


def hetero_classifier(x, wp):
    xbd = pack_features(x)                                  # layout plumbing, outside the kernel
    out = pl.pallas_call(
        hetero_classifier_kernel,
        out_shape=jax.ShapeDtypeStruct((1, C_PAD), jnp.float32),
        in_specs=[pl.BlockSpec(memory_space=pltpu.MemorySpace.VMEM)] * 2,
        out_specs=pl.BlockSpec(memory_space=pltpu.MemorySpace.VMEM),
        cost_estimate=_cost_estimate(),
    )(xbd, wp)
    return out[:, :N_CLASSES]


# ----- host-side packing ------------------------------------------------------
def pack_features(x):
    """Block-diagonal feature operand: block r = X[src(r)] (relation slot 3 zero)."""
    xbd = jnp.zeros((XBD_ROWS, XBD_COLS), jnp.float32)
    for r, (_, s, _) in enumerate(RELS):
        xbd = xbd.at[r * N:(r + 1) * N, r * IN_DIM:(r + 1) * IN_DIM].set(x[s])
    return xbd.astype(jnp.bfloat16)


def pack_graph_and_params(a, w1, b1, w2, b2, wc, bc):
    """Pack graph structure + all weights/biases into ONE bf16 slab (done once)."""
    wp = jnp.zeros((WP_ROWS, WP_COLS), jnp.float32)

    # W1 vstack (relation order), lane-replicated across the 4 relation slots.
    w1stack = jnp.zeros((RSLOTS * IN_DIM, HID), jnp.float32)
    for r in range(N_RELS):
        w1stack = w1stack.at[r * IN_DIM:(r + 1) * IN_DIM, :].set(w1[r])
    for s in range(RSLOTS):
        wp = wp.at[W1_ROW:W1_ROW + RSLOTS * IN_DIM, s * HID:(s + 1) * HID].set(w1stack)

    # Block adjacency: Abig[dst-block d, rel-block r] = A_norm_r iff dst(r) == d.
    for r, (_, _, d) in enumerate(RELS):
        wp = wp.at[A_ROW + d * N:A_ROW + (d + 1) * N, r * N:(r + 1) * N].set(a[r])

    # Per-dst conv1 bias sum, broadcast over N rows, lane-replicated across the 4 slots.
    # TODO(synk): a dst ntype with zero incoming relations yields relu(0) here, whereas DGL's
    # HeteroGraphConv omits that ntype from its output dict; unexercised by this RELS schema.
    for d in range(N_TYPES):
        brow = jnp.zeros((1, HID), jnp.float32)
        for r, (_, _, dd) in enumerate(RELS):
            if dd == d:
                brow = brow + b1[r]
        blk = jnp.tile(brow, (N, 1))
        for s in range(RSLOTS):
            wp = wp.at[B1_ROW + d * N:B1_ROW + (d + 1) * N, s * HID:(s + 1) * HID].set(blk)

    # Readout mask with values: M3[src(r)*N + n, r*HID + h] = u_r[n] = ((1/N) 1^T A_r)[n].
    for r, (_, s, _) in enumerate(RELS):
        u = a[r].mean(axis=0)                                            # (N,)
        wp = wp.at[M3_ROW + s * N:M3_ROW + (s + 1) * N,
                   r * HID:(r + 1) * HID].set(jnp.tile(u[:, None], (1, HID)))

    # Folded tail weight vstack_r (W2_r @ Wc) and folded tail bias.
    for r in range(N_RELS):
        wp = wp.at[F_ROW + r * HID:F_ROW + (r + 1) * HID, 0:N_CLASSES].set(w2[r] @ wc)
    b_fold = sum(b2[r] @ wc for r in range(N_RELS)) + bc                 # (1, C)
    wp = wp.at[BF_ROW:BF_ROW + 1, 0:N_CLASSES].set(b_fold)

    return wp.astype(jnp.bfloat16)


# ----- glue: deterministic graph + parameter construction (plain JAX) ---------
def build_normalized_adjacencies(key):
    adjs = []
    for _ in RELS:
        key, sub = jax.random.split(key)
        e = (jax.random.uniform(sub, (N, N)) < 0.4).astype(jnp.float32)   # (dst, src)
        e = jnp.maximum(e, jnp.eye(N, dtype=jnp.float32))                 # in_deg >= 1
        in_deg  = jnp.clip(e.sum(axis=1), 1.0, None)
        out_deg = jnp.clip(e.sum(axis=0), 1.0, None)
        a = (in_deg ** -0.5)[:, None] * e * (out_deg ** -0.5)[None, :]
        adjs.append(a)
    return jnp.stack(adjs), key


def init_params(key):
    ks = jax.random.split(key, 6)
    w1 = 0.1 * jax.random.normal(ks[0], (N_RELS, IN_DIM, HID), jnp.float32)
    b1 = 0.1 * jax.random.normal(ks[1], (N_RELS, 1, HID), jnp.float32)
    w2 = 0.1 * jax.random.normal(ks[2], (N_RELS, HID, HID), jnp.float32)
    b2 = 0.1 * jax.random.normal(ks[3], (N_RELS, 1, HID), jnp.float32)
    wc = 0.1 * jax.random.normal(ks[4], (HID, N_CLASSES), jnp.float32)    # Linear W^T
    bc = 0.1 * jax.random.normal(ks[5], (1, N_CLASSES), jnp.float32)
    return w1, b1, w2, b2, wc, bc


def reference(x, a, w1, b1, w2, b2, wc, bc):
    h1 = [jnp.zeros((N, HID), jnp.float32) for _ in range(N_TYPES)]
    for r, (_, s, d) in enumerate(RELS):
        h1[d] = h1[d] + (a[r] @ x[s]) @ w1[r] + b1[r]
    h1 = [jax.nn.relu(h) for h in h1]
    h2 = [jnp.zeros((N, HID), jnp.float32) for _ in range(N_TYPES)]
    for r, (_, s, d) in enumerate(RELS):
        h2[d] = h2[d] + (a[r] @ h1[s]) @ w2[r] + b2[r]
    hg = sum(jnp.mean(h, axis=0, keepdims=True) for h in h2)
    return hg @ wc + bc


if __name__ == "__main__":
    key = jax.random.PRNGKey(0)
    key, kx = jax.random.split(key)
    x = jax.random.normal(kx, (N_TYPES, N, IN_DIM), jnp.float32)   # g.ndata['feat'] per ntype
    a, key = build_normalized_adjacencies(key)
    params = init_params(key)

    wp = pack_graph_and_params(a, *params)      # once per (graph, params)

    out = hetero_classifier(x, wp)
    out = jax.block_until_ready(out)

    ref = reference(x, a, *params)
    assert out.shape == (1, N_CLASSES)
    # bf16 MXU operands / bf16-stored constants (f32 accumulation & elementwise) ->
    # compare to the pure-f32 reference with a bf16-level tolerance.
    assert jnp.allclose(out, ref, atol=3e-2, rtol=3e-2), (out, ref)
    print("KERNEL_OK")
</pallas_src>

<mosaic_0001>
module attributes {stable_mosaic.version = 11 : i64} {
  func.func @hetero_classifier_kernel(%arg0: memref<32x64xbf16, #tpu.memory_space<vmem>>, %arg1: memref<256x128xbf16, #tpu.memory_space<vmem>>, %arg2: memref<1x128xf32, #tpu.memory_space<vmem>>) attributes {dimension_semantics = [], scalar_prefetch = 0 : i64, scratch_operands = 0 : i64, tpu.core_type = #tpu.core_type<tc>} {
    %c0 = arith.constant 0 : index
    %c0_0 = arith.constant 0 : index
    %0 = vector.load %arg1[%c0, %c0_0] : memref<256x128xbf16, #tpu.memory_space<vmem>>, vector<64x128xbf16>
    %c0_1 = arith.constant 0 : index
    %c0_2 = arith.constant 0 : index
    %1 = vector.load %arg0[%c0_1, %c0_2] : memref<32x64xbf16, #tpu.memory_space<vmem>>, vector<32x64xbf16>
    %cst = arith.constant dense<0.000000e+00> : vector<32x128xf32>
    %2 = tpu.matmul %1, %0, %cst {dimension_numbers = #tpu.dot_dimension_numbers<[1], [0], [0], [1], [0, 0, 1, 1], [], []>} : vector<32x64xbf16>, vector<64x128xbf16>, vector<32x128xf32> -> vector<32x128xf32>
    %c64 = arith.constant 64 : index
    %c0_3 = arith.constant 0 : index
    %3 = vector.load %arg1[%c64, %c0_3] : memref<256x128xbf16, #tpu.memory_space<vmem>>, vector<16x32xbf16>
    %4 = arith.truncf %2 : vector<32x128xf32> to vector<32x128xbf16>
    %cst_4 = arith.constant dense<0.000000e+00> : vector<16x128xf32>
    %5 = tpu.matmul %3, %4, %cst_4 {dimension_numbers = #tpu.dot_dimension_numbers<[1], [0], [0], [1], [0, 0, 1, 1], [], []>} : vector<16x32xbf16>, vector<32x128xbf16>, vector<16x128xf32> -> vector<16x128xf32>
    %c80 = arith.constant 80 : index
    %c0_5 = arith.constant 0 : index
    %6 = vector.load %arg1[%c80, %c0_5] : memref<256x128xbf16, #tpu.memory_space<vmem>>, vector<16x128xbf16>
    %7 = arith.extf %6 : vector<16x128xbf16> to vector<16x128xf32>
    %8 = arith.addf %5, %7 : vector<16x128xf32>
    %cst_6 = arith.constant 0.000000e+00 : f32
    %9 = vector.broadcast %cst_6 : f32 to vector<16x128xf32>
    %10 = arith.maximumf %8, %9 : vector<16x128xf32>
    %c96 = arith.constant 96 : index
    %c0_7 = arith.constant 0 : index
    %11 = vector.load %arg1[%c96, %c0_7] : memref<256x128xbf16, #tpu.memory_space<vmem>>, vector<16x128xbf16>
    %12 = arith.extf %11 : vector<16x128xbf16> to vector<16x128xf32>
    %13 = arith.mulf %10, %12 : vector<16x128xf32>
    %cst_8 = arith.constant dense<0.000000e+00> : vector<128xf32>
    %14 = vector.multi_reduction <add>, %13, %cst_8 [0] : vector<16x128xf32> to vector<128xf32>
    %15 = vector.shape_cast %14 : vector<128xf32> to vector<1x128xf32>
    %c112 = arith.constant 112 : index
    %c0_9 = arith.constant 0 : index
    %16 = vector.load %arg1[%c112, %c0_9] : memref<256x128xbf16, #tpu.memory_space<vmem>>, vector<128x128xbf16>
    %17 = arith.truncf %15 : vector<1x128xf32> to vector<1x128xbf16>
    %cst_10 = arith.constant dense<0.000000e+00> : vector<1x128xf32>
    %18 = tpu.matmul %17, %16, %cst_10 {dimension_numbers = #tpu.dot_dimension_numbers<[1], [0], [0], [1], [0, 0, 1, 1], [], []>} : vector<1x128xbf16>, vector<128x128xbf16>, vector<1x128xf32> -> vector<1x128xf32>
    %c240 = arith.constant 240 : index
    %c0_11 = arith.constant 0 : index
    %19 = vector.load %arg1[%c240, %c0_11] : memref<256x128xbf16, #tpu.memory_space<vmem>>, vector<1x128xbf16>
    %20 = arith.extf %19 : vector<1x128xbf16> to vector<1x128xf32>
    %21 = arith.addf %18, %20 : vector<1x128xf32>
    %c0_12 = arith.constant 0 : index
    %c0_13 = arith.constant 0 : index
    %22 = vector.load %arg2[%c0_12, %c0_13] : memref<1x128xf32, #tpu.memory_space<vmem>>, vector<1x128xf32>
    tpu.vector_store %arg2[%c0_12, %c0_13], %21 {strides = array<i32>} : memref<1x128xf32, #tpu.memory_space<vmem>>, vector<1x128xf32>,
    return
  }
}

</mosaic_0001>

<llo_original>
// kernel: tpu_custom_call.1
$region0: #{tpu_custom_call.1}
  #allocation0 [shape = 'u32[]', space=smem, size = 0x4, offset = 0x4, fixed_abs, tag = 'smem constant byte address 0x4 - core index']
  #allocation1 [shape = 'u32[144,128]{1,0:T(1,128)}', space=vmem, size = 0x12000, scoped, tag = 'internal scratch']
  %s0 = inlined_call_operand.hbm [shape: bf16[32,64], index: 0, kind: input, shape index: {}]
  %s1 = inlined_call_operand.hbm [shape: bf16[256,128], index: 1, kind: input, shape index: {}]
  %s2 = inlined_call_operand.hbm [shape: f32[1,128], index: 2, kind: output, shape index: {}]
  %s3 = sld [smem:[#allocation0]]
  $region26: #{tpu_custom_call.1} parent=0
    _
  %s5 = ssub.s32 1, %s3
  %s6 = scalar_select 0, %s5, %s3
  $region1: #{tpu_custom_call.1} parent=0
    #allocation2 [shape = 'u8[8192]{0}', space=vmem, size = 0x2000, scoped, tag = 'input window, operand 0, single buffered']
    #allocation3 [shape = 's32[1]{0}', space=sflag, size = 0x4, scoped, tag = 'scoped memory for tpu_custom_call.1']
    #allocation4 [shape = 's32[1]{0}', space=sflag, size = 0x4, scoped, tag = 'scoped memory for tpu_custom_call.1']
    #allocation5 [shape = 'u8[65536]{0}', space=vmem, size = 0x10000, scoped, tag = 'input window, operand 1, single buffered']
    #allocation6 [shape = 's32[1]{0}', space=sflag, size = 0x4, scoped, tag = 'scoped memory for tpu_custom_call.1']
    #allocation7 [shape = 'u8[512]{0}', space=vmem, size = 0x400, scoped, tag = 'output window, operand 0, single buffered']
    %7 = vsyncpa [#allocation3], 0
    %8 = vsyncpa [#allocation6], 0
    %9 = vsyncpa [#allocation4], 0
    // Predicated region
    $region2: #{tpu_custom_call.1} parent=1 // pred_check
      _
    $region3: #{tpu_custom_call.1} parent=1 // pred_check_branch
      %11 = sbr.rel (0) target = $region5
    $region4: #{tpu_custom_call.1} parent=1 // pred_region
      %s13 = ssub.s32 256, 256
      %14 = vsyncadd [#allocation3], %s13
      %s15 = sshll.u32 [#allocation2], 4
      %s16 = int_to_ptr.vmem [resolvable:$true] %s15
      %21 = dma.hbm_to_vmem [thread:$0]  %s0, 256, %s16, [#allocation3], 64, 64, 4
    $region5: #{tpu_custom_call.1} parent=1 // pred_fallthru
      _
    // Predicated region
    $region6: #{tpu_custom_call.1} parent=1 // pred_check
      _
    $region7: #{tpu_custom_call.1} parent=1 // pred_check_branch
      %23 = sbr.rel (0) target = $region9
    $region8: #{tpu_custom_call.1} parent=1 // pred_region
      %s25 = ssub.s32 2048, 2048
      %26 = vsyncadd [#allocation6], %s25
      %s27 = sshll.u32 [#allocation5], 4
      %s28 = int_to_ptr.vmem [resolvable:$true] %s27
      %33 = dma.hbm_to_vmem [thread:$0]  %s1, 2048, %s28, [#allocation6], 64, 64, 4
    $region9: #{tpu_custom_call.1} parent=1 // pred_fallthru
      _
    // Predicated region
    $region10: #{tpu_custom_call.1} parent=1 // pred_check
      _
    $region11: #{tpu_custom_call.1} parent=1 // pred_check_branch
      %35 = sbr.rel (0) target = $region13
    $region12: #{tpu_custom_call.1} parent=1 // pred_region
      %36 = dma.done [#allocation3], 256
    $region13: #{tpu_custom_call.1} parent=1 // pred_fallthru
      _
    // Predicated region
    $region14: #{tpu_custom_call.1} parent=1 // pred_check
      _
    $region15: #{tpu_custom_call.1} parent=1 // pred_check_branch
      %38 = sbr.rel (0) target = $region17
    $region16: #{tpu_custom_call.1} parent=1 // pred_region
      %39 = dma.done [#allocation6], 2048
    $region17: #{tpu_custom_call.1} parent=1 // pred_fallthru
      _
    %v41 = vld [vmem:[#allocation5] sm:$0xf]
    %v42 = vld [vmem:[#allocation5 + $0x4] sm:$0xf]
    %v43 = vld [vmem:[#allocation5 + $0x8] sm:$0xf]
    %v44 = vld [vmem:[#allocation5 + $0xc] sm:$0xf]
    %v45 = vld [vmem:[#allocation5 + $0x10] sm:$0xf]
    %v46 = vld [vmem:[#allocation5 + $0x14] sm:$0xf]
    %v47 = vld [vmem:[#allocation5 + $0x18] sm:$0xf]
    %v48 = vld [vmem:[#allocation5 + $0x1c] sm:$0xf]
    %v49 = vld [vmem:[#allocation2] sm:$0xf]
    %v50 = vld [vmem:[#allocation2 + $0x4] sm:$0xf]
    %v51 = vld [vmem:[#allocation2 + $0x8] sm:$0xf]
    %v52 = vld [vmem:[#allocation2 + $0xc] sm:$0xf]
    %v57 = vunpack.c.l.b16 %v49
    %v58 = vunpack.c.l.b16 %v50
    %v59 = vunpack.c.l.b16 %v51
    %v60 = vunpack.c.l.b16 %v52
    %v61 = vpack.c.b16 %v58, %v57
    %v62 = vpack.c.b16 %v60, %v59
    %v71 = vunpack.c.l.b16 %v41
    %v72 = vunpack.c.l.b16 %v42
    %v73 = vunpack.c.l.b16 %v43
    %v74 = vunpack.c.l.b16 %v44
    %v75 = vunpack.c.l.b16 %v45
    %v76 = vunpack.c.l.b16 %v46
    %v77 = vunpack.c.l.b16 %v47
    %v78 = vunpack.c.l.b16 %v48
    %v79 = vpack.c.b16 %v72, %v71
    %v80 = vpack.c.b16 %v74, %v73
    %v81 = vpack.c.b16 %v76, %v75
    %v82 = vpack.c.b16 %v78, %v77
    %vm87 = vcmask 523264
    %v89 = vsel %vm87, %v61, 0
    %v92 = vsel %vm87, %v62, 0
    %94 = vmatprep.subr.bf16.mxu0 0
    %95 = vmatpush1.bf16.msra.mxu0 %v79
    %96 = vmatprep.subr.bf16.mxu0 0
    %97 = vmatpush1.bf16.msra.mxu0 %v80
    %98 = vmatprep.subr.bf16.mxu0 0
    %99 = vmatpush1.bf16.msra.mxu0 %v81
    %100 = vmatprep.subr.bf16.mxu0 0
    %101 = vmatpush1.bf16.msra.mxu0 %v82
    %102 = vmatprep.subr.bf16.mxu0 0
    %103 = vmatpush1.bf16.msra.mxu0 0
    %104 = vmatprep.subr.bf16.mxu0 0
    %105 = vmatpush1.bf16.msra.mxu0 0
    %106 = vmatprep.subr.bf16.mxu0 0
    %107 = vmatpush1.bf16.msra.mxu0 0
    %108 = vmatprep.subr.bf16.mxu0 0
    %109 = vmatpush1.bf16.msra.mxu0 0
    %110 = vmatprep.subr.bf16.mxu0 0
    %111 = vmatpush1.bf16.msra.mxu0 0
    %112 = vmatprep.subr.bf16.mxu0 0
    %113 = vmatpush1.bf16.msra.mxu0 0
    %114 = vmatprep.subr.bf16.mxu0 0
    %115 = vmatpush1.bf16.msra.mxu0 0
    %116 = vmatprep.subr.bf16.mxu0 0
    %117 = vmatpush1.bf16.msra.mxu0 0
    %118 = vmatprep.subr.bf16.mxu0 0
    %119 = vmatpush1.bf16.msra.mxu0 0
    %120 = vmatprep.subr.bf16.mxu0 0
    %121 = vmatpush1.bf16.msra.mxu0 0
    %122 = vmatprep.subr.bf16.mxu0 0
    %123 = vmatpush1.bf16.msra.mxu0 0
    %124 = vmatprep.subr.bf16.mxu0 0
    %125 = vmatpush1.bf16.msra.mxu0 0
    %126 = vmatprep.mubr.bf16.mxu0 0
    %127 = vmatmul.mubr.bf16.gmra.mrb[0].mxu0 %v89
    %v128 = vpop.f32.mrb[0].mxu0
    %v129 = vadd.f32 0.0, %v128
    %v130 = vpop.f32.mrb[0].mxu0
    %v131 = vpop.f32.mrb[0].mxu0
    %v132 = vadd.f32 0.0, %v131
    %v133 = vpop.f32.mrb[0].mxu0
    %134 = vmatprep.mubr.bf16.mxu0 0
    %135 = vmatmul.mubr.bf16.gmra.mrb[0].mxu0 %v92
    %v136 = vpop.f32.mrb[0].mxu0
    %v137 = vadd.f32 0.0, %v136
    %v138 = vpop.f32.mrb[0].mxu0
    %v139 = vpop.f32.mrb[0].mxu0
    %v140 = vadd.f32 0.0, %v139
    %v141 = vpop.f32.mrb[0].mxu0
    %142 = vdwg.mxu0
    %v143 = vld [vmem:[#allocation5 + $0x20] sm:$0xf]
    %v144 = vld [vmem:[#allocation5 + $0x24] sm:$0xf]
    %v145 = vpack.c.bf16 %v132, %v129
    %v146 = vpack.c.bf16 %v140, %v137
    %v147 = vld [vmem:[#allocation5 + $0x28] sm:$0xf]
    %v148 = vld [vmem:[#allocation5 + $0x2c] sm:$0xf]
    %v149 = vunpack.c.l.bf16 %v147
    %v150 = vunpack.c.l.bf16 %v148
    %v153 = vunpack.c.l.b16 %v143
    %v154 = vunpack.c.l.b16 %v144
    %v155 = vpack.c.b16 %v154, %v153
    %vm156 = vcmask 261120
    %v158 = vsel %vm156, %v155, 0
    %160 = vmatprep.subr.bf16.mxu0 0
    %161 = vmatpush1.bf16.msra.mxu0 %v145
    %162 = vmatprep.subr.bf16.mxu0 0
    %163 = vmatpush1.bf16.msra.mxu0 %v146
    %164 = vmatprep.subr.bf16.mxu0 0
    %165 = vmatpush1.bf16.msra.mxu0 0
    %166 = vmatprep.subr.bf16.mxu0 0
    %167 = vmatpush1.bf16.msra.mxu0 0
    %168 = vmatprep.subr.bf16.mxu0 0
    %169 = vmatpush1.bf16.msra.mxu0 0
    %170 = vmatprep.subr.bf16.mxu0 0
    %171 = vmatpush1.bf16.msra.mxu0 0
    %172 = vmatprep.subr.bf16.mxu0 0
    %173 = vmatpush1.bf16.msra.mxu0 0
    %174 = vmatprep.subr.bf16.mxu0 0
    %175 = vmatpush1.bf16.msra.mxu0 0
    %176 = vmatprep.subr.bf16.mxu0 0
    %177 = vmatpush1.bf16.msra.mxu0 0
    %178 = vmatprep.subr.bf16.mxu0 0
    %179 = vmatpush1.bf16.msra.mxu0 0
    %180 = vmatprep.subr.bf16.mxu0 0
    %181 = vmatpush1.bf16.msra.mxu0 0
    %182 = vmatprep.subr.bf16.mxu0 0
    %183 = vmatpush1.bf16.msra.mxu0 0
    %184 = vmatprep.subr.bf16.mxu0 0
    %185 = vmatpush1.bf16.msra.mxu0 0
    %186 = vmatprep.subr.bf16.mxu0 0
    %187 = vmatpush1.bf16.msra.mxu0 0
    %188 = vmatprep.subr.bf16.mxu0 0
    %189 = vmatpush1.bf16.msra.mxu0 0
    %190 = vmatprep.subr.bf16.mxu0 0
    %191 = vmatpush1.bf16.msra.mxu0 0
    %192 = vmatprep.mubr.bf16.mxu0 0
    %193 = vmatmul.mubr.bf16.gmra.mrb[0].mxu0 %v158
    %v194 = vpop.f32.mrb[0].mxu0
    %v195 = vadd.f32 %v149, %v194
    %v196 = vpop.f32.mrb[0].mxu0
    %v197 = vpop.f32.mrb[0].mxu0
    %v198 = vadd.f32 %v150, %v197
    %v199 = vpop.f32.mrb[0].mxu0
    %200 = vdwg.mxu0
    %v201 = vmax.f32 %v195, 0.0
    %v202 = vmax.f32 %v198, 0.0
    %v203 = vld [vmem:[#allocation5 + $0x30] sm:$0xf]
    %v204 = vld [vmem:[#allocation5 + $0x34] sm:$0xf]
    %v205 = vunpack.c.l.bf16 %v203
    %v206 = vunpack.c.l.bf16 %v204
    %v207 = vmul.f32 %v201, %v205
    %v208 = vmul.f32 %v202, %v206
    %v209 = vadd.f32 %v207, %v208
    %v210 = vrot.slane %v209, 4
    %v211 = vadd.f32 %v209, %v210
    %v212 = vrot.slane %v211, 2
    %v213 = vadd.f32 %v211, %v212
    %v214 = vrot.slane %v213, 1
    %v215 = vadd.f32 %v213, %v214
    %v216 = vld [vmem:[#allocation5 + $0x38] sm:$0xf]
    %v217 = vld [vmem:[#allocation5 + $0x3c] sm:$0xf]
    %v218 = vld [vmem:[#allocation5 + $0x40] sm:$0xf]
    %v219 = vld [vmem:[#allocation5 + $0x44] sm:$0xf]
    %v220 = vld [vmem:[#allocation5 + $0x48] sm:$0xf]
    %v221 = vld [vmem:[#allocation5 + $0x4c] sm:$0xf]
    %v222 = vld [vmem:[#allocation5 + $0x50] sm:$0xf]
    %v223 = vld [vmem:[#allocation5 + $0x54] sm:$0xf]
    %v224 = vld [vmem:[#allocation5 + $0x58] sm:$0xf]
    %v225 = vld [vmem:[#allocation5 + $0x5c] sm:$0xf]
    %v226 = vld [vmem:[#allocation5 + $0x60] sm:$0xf]
    %v227 = vld [vmem:[#allocation5 + $0x64] sm:$0xf]
    %v228 = vld [vmem:[#allocation5 + $0x68] sm:$0xf]
    %v229 = vld [vmem:[#allocation5 + $0x6c] sm:$0xf]
    %v230 = vld [vmem:[#allocation5 + $0x70] sm:$0xf]
    %v231 = vld [vmem:[#allocation5 + $0x74] sm:$0xf]
    %v232 = vpack.c.bf16 %v215, %v215
    %v233 = vld [vmem:[#allocation5 + $0x78] sm:$0x1]
    %v234 = vunpack.c.l.bf16 %v233
    %v251 = vunpack.c.l.b16 %v216
    %v252 = vunpack.c.l.b16 %v217
    %v253 = vunpack.c.l.b16 %v218
    %v254 = vunpack.c.l.b16 %v219
    %v255 = vunpack.c.l.b16 %v220
    %v256 = vunpack.c.l.b16 %v221
    %v257 = vunpack.c.l.b16 %v222
    %v258 = vunpack.c.l.b16 %v223
    %v259 = vunpack.c.l.b16 %v224
    %v260 = vunpack.c.l.b16 %v225
    %v261 = vunpack.c.l.b16 %v226
    %v262 = vunpack.c.l.b16 %v227
    %v263 = vunpack.c.l.b16 %v228
    %v264 = vunpack.c.l.b16 %v229
    %v265 = vunpack.c.l.b16 %v230
    %v266 = vunpack.c.l.b16 %v231
    %v267 = vpack.c.b16 %v252, %v251
    %v268 = vpack.c.b16 %v254, %v253
    %v269 = vpack.c.b16 %v256, %v255
    %v270 = vpack.c.b16 %v258, %v257
    %v271 = vpack.c.b16 %v260, %v259
    %v272 = vpack.c.b16 %v262, %v261
    %v273 = vpack.c.b16 %v264, %v263
    %v274 = vpack.c.b16 %v266, %v265
    %283 = vmatprep.subr.bf16.mxu0 0
    %284 = vmatpush1.bf16.msra.mxu0 %v267
    %285 = vmatprep.subr.bf16.mxu0 0
    %286 = vmatpush1.bf16.msra.mxu0 %v268
    %287 = vmatprep.subr.bf16.mxu0 0
    %288 = vmatpush1.bf16.msra.mxu0 %v269
    %289 = vmatprep.subr.bf16.mxu0 0
    %290 = vmatpush1.bf16.msra.mxu0 %v270
    %291 = vmatprep.subr.bf16.mxu0 0
    %292 = vmatpush1.bf16.msra.mxu0 %v271
    %293 = vmatprep.subr.bf16.mxu0 0
    %294 = vmatpush1.bf16.msra.mxu0 %v272
    %295 = vmatprep.subr.bf16.mxu0 0
    %296 = vmatpush1.bf16.msra.mxu0 %v273
    %297 = vmatprep.subr.bf16.mxu0 0
    %298 = vmatpush1.bf16.msra.mxu0 %v274
    %299 = vmatprep.subr.bf16.mxu0 0
    %300 = vmatpush1.bf16.msra.mxu0 0
    %301 = vmatprep.subr.bf16.mxu0 0
    %302 = vmatpush1.bf16.msra.mxu0 0
    %303 = vmatprep.subr.bf16.mxu0 0
    %304 = vmatpush1.bf16.msra.mxu0 0
    %305 = vmatprep.subr.bf16.mxu0 0
    %306 = vmatpush1.bf16.msra.mxu0 0
    %307 = vmatprep.subr.bf16.mxu0 0
    %308 = vmatpush1.bf16.msra.mxu0 0
    %309 = vmatprep.subr.bf16.mxu0 0
    %310 = vmatpush1.bf16.msra.mxu0 0
    %311 = vmatprep.subr.bf16.mxu0 0
    %312 = vmatpush1.bf16.msra.mxu0 0
    %313 = vmatprep.subr.bf16.mxu0 0
    %314 = vmatpush1.bf16.msra.mxu0 0
    %315 = vmatprep.mubr.bf16.mxu0 0
    %316 = vmatmul.mubr.bf16.gmra.mrb[0].mxu0 %v232
    %v317 = vpop.f32.mrb[0].mxu0
    %v318 = vadd.f32 %v234, %v317
    %v319 = vpop.f32.mrb[0].mxu0
    %v320 = vpop.f32.mrb[0].mxu0
    %v321 = vpop.f32.mrb[0].mxu0
    %322 = vdwg.mxu0
    %323 = vst [vmem:[#allocation7] sm:$0x1] %v318
    // Predicated region
    $region18: #{tpu_custom_call.1} parent=1 // pred_check
      _
    $region19: #{tpu_custom_call.1} parent=1 // pred_check_branch
      %325 = sbr.rel (0) target = $region21
    $region20: #{tpu_custom_call.1} parent=1 // pred_region
      %s327 = ssub.s32 16, 16
      %328 = vsyncadd [#allocation4], %s327
      %s330 = sshll.u32 [#allocation7], 4
      %s331 = int_to_ptr.vmem [resolvable:$true] %s330
      %333 = dma.vmem_to_hbm [thread:$0]  %s331, 16, %s2, [#allocation4]
    $region21: #{tpu_custom_call.1} parent=1 // pred_fallthru
      _
    // Predicated region
    $region22: #{tpu_custom_call.1} parent=1 // pred_check
      _
    $region23: #{tpu_custom_call.1} parent=1 // pred_check_branch
      %335 = sbr.rel (0) target = $region25
    $region24: #{tpu_custom_call.1} parent=1 // pred_region
      %336 = dma.done [#allocation4], 16
    $region25: #{tpu_custom_call.1} parent=1 // pred_fallthru
      _
    %337 = vsyncpa [#allocation3], 1
    %338 = vsyncpa [#allocation6], 1
    %339 = vsyncpa [#allocation4], 1

</llo_original>
